<compile_context>
chip_gen: v7x
topology: tpu7x:2x2x1
jax: 0.10.0
libtpu: 0.0.40
codegen_flags: <defaults>
</compile_context>

<pallas_src>
import functools

import jax
import jax.numpy as jnp
from jax.experimental import pallas as pl
from jax.experimental.pallas import tpu as pltpu

_LANE = 128      # lane width of a vreg
_SUBLANE = 8     # sublane count of a vreg (f32)


def _round_up(n, m):
    return ((n + m - 1) // m) * m


def _pack_params(w1, b1, w2, b2):
    """Pack (W1, b1, W2, b2) into one lane-dense, tile-aligned f32 slab.

    Layout (all rows are 128 lanes wide, zero-padded):
      rows [0, d_in)                 : W1   -> cols [0, hidden)
      row  b1_row (= ceil8(d_in))    : b1   -> cols [0, hidden)
      rows [w2_row, w2_row + 128)    : W2   -> rows [0, hidden), cols [0, n_classes)
      row  b2_row (= w2_row + 128)   : b2   -> cols [0, n_classes)
    W2 is padded to 128 rows so the (B, 128) hidden activation slab can be
    multiplied directly (padded hidden lanes are zero, padded W2 rows are zero).
    """
    d_in, hidden = w1.shape
    n_classes = w2.shape[1]

    b1_row = _round_up(d_in, _SUBLANE)
    w2_row = _round_up(b1_row + 1, _SUBLANE)
    b2_row = w2_row + _LANE
    total_rows = _round_up(b2_row + 1, _SUBLANE)

    slab = jnp.zeros((total_rows, _LANE), dtype=jnp.float32)
    slab = slab.at[0:d_in, 0:hidden].set(w1.astype(jnp.float32))
    slab = slab.at[b1_row, 0:hidden].set(b1.reshape(-1).astype(jnp.float32))
    slab = slab.at[w2_row:w2_row + hidden, 0:n_classes].set(w2.astype(jnp.float32))
    slab = slab.at[b2_row, 0:n_classes].set(b2.reshape(-1).astype(jnp.float32))

    layout = dict(d_in=d_in, hidden=hidden, n_classes=n_classes,
                  b1_row=b1_row, w2_row=w2_row, b2_row=b2_row,
                  total_rows=total_rows)
    return slab, layout


def _mlp_kernel(x_ref, p_ref, out_ref, *, d_in, b1_row, w2_row, b2_row):
    """Fused MLP discriminator head: out = relu(x @ W1 + b1) @ W2 + b2.

    All parameter slices are tile-aligned (row offsets are multiples of 8,
    full 128-lane width), so no relayout copies are generated.
    """
    x = x_ref[...]                                   # (B, d_in) f32

    w1 = p_ref[0:d_in, :]                            # (d_in, 128), cols >= hidden are 0
    b1 = p_ref[b1_row:b1_row + 1, :]                 # (1, 128)
    h = jnp.maximum(
        jnp.dot(x, w1, preferred_element_type=jnp.float32) + b1, 0.0)
    # h is (B, 128); lanes >= hidden are relu(0 + 0) == 0.

    w2 = p_ref[w2_row:w2_row + _LANE, :]             # (128, 128), padded rows/cols are 0
    b2 = p_ref[b2_row:b2_row + 1, :]                 # (1, 128)
    out_ref[...] = jnp.dot(h, w2, preferred_element_type=jnp.float32) + b2


def batch_discriminator(x, w1, b1, w2, b2):
    """BatchDiscriminator.forward(x) with a fused 2-layer MLP `net`.

    x : (batch, d_in) float32
    w1: (d_in, hidden), b1: (hidden,), w2: (hidden, n_classes), b2: (n_classes,)
    Returns (batch, n_classes) float32 logits.
    """
    batch = x.shape[0]
    params, lo = _pack_params(w1, b1, w2, b2)

    kernel = functools.partial(
        _mlp_kernel, d_in=lo["d_in"], b1_row=lo["b1_row"],
        w2_row=lo["w2_row"], b2_row=lo["b2_row"])

    flops = 2 * batch * (lo["d_in"] * _LANE + _LANE * _LANE)
    bytes_accessed = (x.size + params.size + batch * _LANE) * 4

    logits_padded = pl.pallas_call(
        kernel,
        out_shape=jax.ShapeDtypeStruct((batch, _LANE), jnp.float32),
        # No grid: single invocation, whole arrays resident in VMEM,
        # no pipelining machinery, two input DMAs total (x + packed params).
        in_specs=[
            pl.BlockSpec(memory_space=pltpu.MemorySpace.VMEM),
            pl.BlockSpec(memory_space=pltpu.MemorySpace.VMEM),
        ],
        out_specs=pl.BlockSpec(memory_space=pltpu.MemorySpace.VMEM),
        cost_estimate=pl.CostEstimate(
            flops=flops, transcendentals=0, bytes_accessed=bytes_accessed),
    )(x, params)

    # Lane-dense kernel output; trim the zero-padded class lanes outside.
    return logits_padded[:, :lo["n_classes"]]


def _reference(x, w1, b1, w2, b2):
    """Pure-JAX reference for correctness check."""
    h = jnp.maximum(x @ w1 + b1, 0.0)
    return h @ w2 + b2


if __name__ == "__main__":
    # Small shapes consistent with a latent-feature batch discriminator:
    #   batch=8, in_features=32, hidden=64, n_batches(classes)=8
    B, D_IN, HIDDEN, N_CLASSES = 8, 32, 64, 8

    key = jax.random.PRNGKey(0)
    kx, kw1, kb1, kw2, kb2 = jax.random.split(key, 5)

    x = jax.random.normal(kx, (B, D_IN), dtype=jnp.float32)
    w1 = jax.random.normal(kw1, (D_IN, HIDDEN), dtype=jnp.float32) / jnp.sqrt(D_IN)
    b1 = jax.random.normal(kb1, (HIDDEN,), dtype=jnp.float32) * 0.01
    w2 = jax.random.normal(kw2, (HIDDEN, N_CLASSES), dtype=jnp.float32) / jnp.sqrt(HIDDEN)
    b2 = jax.random.normal(kb2, (N_CLASSES,), dtype=jnp.float32) * 0.01

    logits = jax.block_until_ready(batch_discriminator(x, w1, b1, w2, b2))

    ref = _reference(x, w1, b1, w2, b2)
    assert logits.shape == (B, N_CLASSES)
    assert jnp.allclose(logits, ref, atol=1e-4, rtol=1e-4), "mismatch vs reference"

    print("KERNEL_OK")
</pallas_src>

<mosaic_0001>
module attributes {stable_mosaic.version = 11 : i64} {
  func.func @_mlp_kernel(%arg0: memref<8x32xf32, #tpu.memory_space<vmem>>, %arg1: memref<176x128xf32, #tpu.memory_space<vmem>>, %arg2: memref<8x128xf32, #tpu.memory_space<vmem>>) attributes {dimension_semantics = [], scalar_prefetch = 0 : i64, scratch_operands = 0 : i64, tpu.core_type = #tpu.core_type<tc>} {
    %c0 = arith.constant 0 : index
    %c0_0 = arith.constant 0 : index
    %0 = vector.load %arg0[%c0, %c0_0] : memref<8x32xf32, #tpu.memory_space<vmem>>, vector<8x32xf32>
    %c0_1 = arith.constant 0 : index
    %c0_2 = arith.constant 0 : index
    %1 = vector.load %arg1[%c0_1, %c0_2] : memref<176x128xf32, #tpu.memory_space<vmem>>, vector<32x128xf32>
    %c32 = arith.constant 32 : index
    %c0_3 = arith.constant 0 : index
    %2 = vector.load %arg1[%c32, %c0_3] : memref<176x128xf32, #tpu.memory_space<vmem>>, vector<1x128xf32>
    %cst = arith.constant dense<0.000000e+00> : vector<8x128xf32>
    %3 = tpu.matmul %0, %1, %cst {dimension_numbers = #tpu.dot_dimension_numbers<[1], [0], [0], [1], [0, 0, 1, 1], [], []>} : vector<8x32xf32>, vector<32x128xf32>, vector<8x128xf32> -> vector<8x128xf32>
    %4 = vector.broadcast %2 : vector<1x128xf32> to vector<8x128xf32>
    %5 = arith.addf %3, %4 : vector<8x128xf32>
    %cst_4 = arith.constant 0.000000e+00 : f32
    %6 = vector.broadcast %cst_4 : f32 to vector<8x128xf32>
    %7 = arith.maximumf %5, %6 : vector<8x128xf32>
    %c40 = arith.constant 40 : index
    %c0_5 = arith.constant 0 : index
    %8 = vector.load %arg1[%c40, %c0_5] : memref<176x128xf32, #tpu.memory_space<vmem>>, vector<128x128xf32>
    %c168 = arith.constant 168 : index
    %c0_6 = arith.constant 0 : index
    %9 = vector.load %arg1[%c168, %c0_6] : memref<176x128xf32, #tpu.memory_space<vmem>>, vector<1x128xf32>
    %cst_7 = arith.constant dense<0.000000e+00> : vector<8x128xf32>
    %10 = tpu.matmul %7, %8, %cst_7 {dimension_numbers = #tpu.dot_dimension_numbers<[1], [0], [0], [1], [0, 0, 1, 1], [], []>} : vector<8x128xf32>, vector<128x128xf32>, vector<8x128xf32> -> vector<8x128xf32>
    %11 = vector.broadcast %9 : vector<1x128xf32> to vector<8x128xf32>
    %12 = arith.addf %10, %11 : vector<8x128xf32>
    %c0_8 = arith.constant 0 : index
    %c0_9 = arith.constant 0 : index
    %13 = vector.load %arg2[%c0_8, %c0_9] : memref<8x128xf32, #tpu.memory_space<vmem>>, vector<8x128xf32>
    tpu.vector_store %arg2[%c0_8, %c0_9], %12 {strides = array<i32>} : memref<8x128xf32, #tpu.memory_space<vmem>>, vector<8x128xf32>,
    return
  }
}

</mosaic_0001>

<llo_original>
// kernel: tpu_custom_call.1
$region0: #{tpu_custom_call.1}
  #allocation0 [shape = 'u32[]', space=smem, size = 0x4, offset = 0x4, fixed_abs, tag = 'smem constant byte address 0x4 - core index']
  #allocation1 [shape = 'u32[144,128]{1,0:T(1,128)}', space=vmem, size = 0x12000, scoped, tag = 'internal scratch']
  %s0 = inlined_call_operand.hbm [shape: f32[8,32], index: 0, kind: input, shape index: {}]
  %s1 = inlined_call_operand.hbm [shape: f32[176,128], index: 1, kind: input, shape index: {}]
  %s2 = inlined_call_operand.hbm [shape: f32[8,128], index: 2, kind: output, shape index: {}]
  %s3 = sld [smem:[#allocation0]]
  $region26: #{tpu_custom_call.1} parent=0
    _
  %s5 = ssub.s32 1, %s3
  %s6 = scalar_select 0, %s5, %s3
  $region1: #{tpu_custom_call.1} parent=0
    #allocation2 [shape = 'u8[4096]{0}', space=vmem, size = 0x1000, scoped, tag = 'input window, operand 0, single buffered']
    #allocation3 [shape = 's32[1]{0}', space=sflag, size = 0x4, scoped, tag = 'scoped memory for tpu_custom_call.1']
    #allocation4 [shape = 's32[1]{0}', space=sflag, size = 0x4, scoped, tag = 'scoped memory for tpu_custom_call.1']
    #allocation5 [shape = 'u8[90112]{0}', space=vmem, size = 0x16000, scoped, tag = 'input window, operand 1, single buffered']
    #allocation6 [shape = 's32[1]{0}', space=sflag, size = 0x4, scoped, tag = 'scoped memory for tpu_custom_call.1']
    #allocation7 [shape = 'u8[4096]{0}', space=vmem, size = 0x1000, scoped, tag = 'output window, operand 0, single buffered']
    %7 = vsyncpa [#allocation3], 0
    %8 = vsyncpa [#allocation6], 0
    %9 = vsyncpa [#allocation4], 0
    // Predicated region
    $region2: #{tpu_custom_call.1} parent=1 // pred_check
      _
    $region3: #{tpu_custom_call.1} parent=1 // pred_check_branch
      %11 = sbr.rel (0) target = $region5
    $region4: #{tpu_custom_call.1} parent=1 // pred_region
      %s13 = ssub.s32 128, 128
      %14 = vsyncadd [#allocation3], %s13
      %s16 = sshll.u32 [#allocation2], 4
      %s17 = int_to_ptr.vmem [resolvable:$true] %s16
      %19 = dma.hbm_to_vmem [thread:$0]  %s0, 128, %s17, [#allocation3]
    $region5: #{tpu_custom_call.1} parent=1 // pred_fallthru
      _
    // Predicated region
    $region6: #{tpu_custom_call.1} parent=1 // pred_check
      _
    $region7: #{tpu_custom_call.1} parent=1 // pred_check_branch
      %21 = sbr.rel (0) target = $region9
    $region8: #{tpu_custom_call.1} parent=1 // pred_region
      %s23 = ssub.s32 2816, 2816
      %24 = vsyncadd [#allocation6], %s23
      %s25 = sshll.u32 [#allocation5], 4
      %s26 = int_to_ptr.vmem [resolvable:$true] %s25
      %31 = dma.hbm_to_vmem [thread:$0]  %s1, 2816, %s26, [#allocation6], 128, 128, 8
    $region9: #{tpu_custom_call.1} parent=1 // pred_fallthru
      _
    // Predicated region
    $region10: #{tpu_custom_call.1} parent=1 // pred_check
      _
    $region11: #{tpu_custom_call.1} parent=1 // pred_check_branch
      %33 = sbr.rel (0) target = $region13
    $region12: #{tpu_custom_call.1} parent=1 // pred_region
      %34 = dma.done [#allocation3], 128
    $region13: #{tpu_custom_call.1} parent=1 // pred_fallthru
      _
    // Predicated region
    $region14: #{tpu_custom_call.1} parent=1 // pred_check
      _
    $region15: #{tpu_custom_call.1} parent=1 // pred_check_branch
      %36 = sbr.rel (0) target = $region17
    $region16: #{tpu_custom_call.1} parent=1 // pred_region
      %37 = dma.done [#allocation6], 2816
    $region17: #{tpu_custom_call.1} parent=1 // pred_fallthru
      _
    %v38 = vld [vmem:[#allocation2] sm:$0xff]
    %v39 = vld [vmem:[#allocation5] sm:$0xff]
    %v40 = vld [vmem:[#allocation5 + $0x8] sm:$0xff]
    %v41 = vld [vmem:[#allocation5 + $0x10] sm:$0xff]
    %v42 = vld [vmem:[#allocation5 + $0x18] sm:$0xff]
    %v43 = vld [vmem:[#allocation5 + $0x20] sm:$0x1]
    %v44 = vlaneseq
    %v45 = vshrl.u32 %v44, 7
    %v46 = vsub.s32 0, %v45
    %v47 = vrot.slane %v43, %v46
    %vm48 = vcmask 261120
    %v50 = vsel %vm48, %v38, 0
    %52 = vmatprep.subr.mxu0 0.0
    %53 = vmatpush1.msra.mxu0 %v39
    %54 = vmatprep.subr.mxu0 0.0
    %55 = vmatpush1.msra.mxu0 %v40
    %56 = vmatprep.subr.mxu0 0.0
    %57 = vmatpush1.msra.mxu0 %v41
    %58 = vmatprep.subr.mxu0 0.0
    %59 = vmatpush1.msra.mxu0 %v42
    %60 = vmatprep.subr.mxu0 0.0
    %61 = vmatpush1.msra.mxu0 0.0
    %62 = vmatprep.subr.mxu0 0.0
    %63 = vmatpush1.msra.mxu0 0.0
    %64 = vmatprep.subr.mxu0 0.0
    %65 = vmatpush1.msra.mxu0 0.0
    %66 = vmatprep.subr.mxu0 0.0
    %67 = vmatpush1.msra.mxu0 0.0
    %68 = vmatprep.subr.mxu0 0.0
    %69 = vmatpush1.msra.mxu0 0.0
    %70 = vmatprep.subr.mxu0 0.0
    %71 = vmatpush1.msra.mxu0 0.0
    %72 = vmatprep.subr.mxu0 0.0
    %73 = vmatpush1.msra.mxu0 0.0
    %74 = vmatprep.subr.mxu0 0.0
    %75 = vmatpush1.msra.mxu0 0.0
    %76 = vmatprep.subr.mxu0 0.0
    %77 = vmatpush1.msra.mxu0 0.0
    %78 = vmatprep.subr.mxu0 0.0
    %79 = vmatpush1.msra.mxu0 0.0
    %80 = vmatprep.subr.mxu0 0.0
    %81 = vmatpush1.msra.mxu0 0.0
    %82 = vmatprep.subr.mxu0 0.0
    %83 = vmatpush1.msra.mxu0 0.0
    %84 = vmatprep.subr.mxu0 0.0
    %85 = vmatpush1.msra.mxu0 0.0
    %86 = vmatprep.subr.mxu0 0.0
    %87 = vmatpush1.msra.mxu0 0.0
    %88 = vmatprep.subr.mxu0 0.0
    %89 = vmatpush1.msra.mxu0 0.0
    %90 = vmatprep.subr.mxu0 0.0
    %91 = vmatpush1.msra.mxu0 0.0
    %92 = vmatprep.subr.mxu0 0.0
    %93 = vmatpush1.msra.mxu0 0.0
    %94 = vmatprep.subr.mxu0 0.0
    %95 = vmatpush1.msra.mxu0 0.0
    %96 = vmatprep.subr.mxu0 0.0
    %97 = vmatpush1.msra.mxu0 0.0
    %98 = vmatprep.subr.mxu0 0.0
    %99 = vmatpush1.msra.mxu0 0.0
    %100 = vmatprep.subr.mxu0 0.0
    %101 = vmatpush1.msra.mxu0 0.0
    %102 = vmatprep.subr.mxu0 0.0
    %103 = vmatpush1.msra.mxu0 0.0
    %104 = vmatprep.subr.mxu0 0.0
    %105 = vmatpush1.msra.mxu0 0.0
    %106 = vmatprep.subr.mxu0 0.0
    %107 = vmatpush1.msra.mxu0 0.0
    %108 = vmatprep.subr.mxu0 0.0
    %109 = vmatpush1.msra.mxu0 0.0
    %110 = vmatprep.subr.mxu0 0.0
    %111 = vmatpush1.msra.mxu0 0.0
    %112 = vmatprep.subr.mxu0 0.0
    %113 = vmatpush1.msra.mxu0 0.0
    %114 = vmatprep.subr.mxu0 0.0
    %115 = vmatpush1.msra.mxu0 0.0
    %116 = vmatprep.mubr.f32.mxu0 0.0
    %117 = vmatmul.mubr.f32.gmra.mrb[0].mxu0 %v50
    %v118 = vpop.f32.mrb[0].mxu0
    %v119 = vadd.f32 %v47, %v118
    %v120 = vpop.f32.mrb[0].mxu0
    %121 = vdwg.mxu0
    %v122 = vmax.f32 %v119, 0.0
    %v123 = vld [vmem:[#allocation5 + $0x28] sm:$0xff]
    %v124 = vld [vmem:[#allocation5 + $0x30] sm:$0xff]
    %v125 = vld [vmem:[#allocation5 + $0x38] sm:$0xff]
    %v126 = vld [vmem:[#allocation5 + $0x40] sm:$0xff]
    %v127 = vld [vmem:[#allocation5 + $0x48] sm:$0xff]
    %v128 = vld [vmem:[#allocation5 + $0x50] sm:$0xff]
    %v129 = vld [vmem:[#allocation5 + $0x58] sm:$0xff]
    %v130 = vld [vmem:[#allocation5 + $0x60] sm:$0xff]
    %v131 = vld [vmem:[#allocation5 + $0x68] sm:$0xff]
    %v132 = vld [vmem:[#allocation5 + $0x70] sm:$0xff]
    %v133 = vld [vmem:[#allocation5 + $0x78] sm:$0xff]
    %v134 = vld [vmem:[#allocation5 + $0x80] sm:$0xff]
    %v135 = vld [vmem:[#allocation5 + $0x88] sm:$0xff]
    %v136 = vld [vmem:[#allocation5 + $0x90] sm:$0xff]
    %v137 = vld [vmem:[#allocation5 + $0x98] sm:$0xff]
    %v138 = vld [vmem:[#allocation5 + $0xa0] sm:$0xff]
    %v139 = vld [vmem:[#allocation5 + $0xa8] sm:$0x1]
    %v140 = vlaneseq
    %v141 = vshrl.u32 %v140, 7
    %v142 = vsub.s32 0, %v141
    %v143 = vrot.slane %v139, %v142
    %144 = vmatprep.subr.mxu0 0.0
    %145 = vmatpush1.msra.mxu0 %v123
    %146 = vmatprep.subr.mxu0 0.0
    %147 = vmatpush1.msra.mxu0 %v124
    %148 = vmatprep.subr.mxu0 0.0
    %149 = vmatpush1.msra.mxu0 %v125
    %150 = vmatprep.subr.mxu0 0.0
    %151 = vmatpush1.msra.mxu0 %v126
    %152 = vmatprep.subr.mxu0 0.0
    %153 = vmatpush1.msra.mxu0 %v127
    %154 = vmatprep.subr.mxu0 0.0
    %155 = vmatpush1.msra.mxu0 %v128
    %156 = vmatprep.subr.mxu0 0.0
    %157 = vmatpush1.msra.mxu0 %v129
    %158 = vmatprep.subr.mxu0 0.0
    %159 = vmatpush1.msra.mxu0 %v130
    %160 = vmatprep.subr.mxu0 0.0
    %161 = vmatpush1.msra.mxu0 %v131
    %162 = vmatprep.subr.mxu0 0.0
    %163 = vmatpush1.msra.mxu0 %v132
    %164 = vmatprep.subr.mxu0 0.0
    %165 = vmatpush1.msra.mxu0 %v133
    %166 = vmatprep.subr.mxu0 0.0
    %167 = vmatpush1.msra.mxu0 %v134
    %168 = vmatprep.subr.mxu0 0.0
    %169 = vmatpush1.msra.mxu0 %v135
    %170 = vmatprep.subr.mxu0 0.0
    %171 = vmatpush1.msra.mxu0 %v136
    %172 = vmatprep.subr.mxu0 0.0
    %173 = vmatpush1.msra.mxu0 %v137
    %174 = vmatprep.subr.mxu0 0.0
    %175 = vmatpush1.msra.mxu0 %v138
    %176 = vmatprep.subr.mxu0 0.0
    %177 = vmatpush1.msra.mxu0 0.0
    %178 = vmatprep.subr.mxu0 0.0
    %179 = vmatpush1.msra.mxu0 0.0
    %180 = vmatprep.subr.mxu0 0.0
    %181 = vmatpush1.msra.mxu0 0.0
    %182 = vmatprep.subr.mxu0 0.0
    %183 = vmatpush1.msra.mxu0 0.0
    %184 = vmatprep.subr.mxu0 0.0
    %185 = vmatpush1.msra.mxu0 0.0
    %186 = vmatprep.subr.mxu0 0.0
    %187 = vmatpush1.msra.mxu0 0.0
    %188 = vmatprep.subr.mxu0 0.0
    %189 = vmatpush1.msra.mxu0 0.0
    %190 = vmatprep.subr.mxu0 0.0
    %191 = vmatpush1.msra.mxu0 0.0
    %192 = vmatprep.subr.mxu0 0.0
    %193 = vmatpush1.msra.mxu0 0.0
    %194 = vmatprep.subr.mxu0 0.0
    %195 = vmatpush1.msra.mxu0 0.0
    %196 = vmatprep.subr.mxu0 0.0
    %197 = vmatpush1.msra.mxu0 0.0
    %198 = vmatprep.subr.mxu0 0.0
    %199 = vmatpush1.msra.mxu0 0.0
    %200 = vmatprep.subr.mxu0 0.0
    %201 = vmatpush1.msra.mxu0 0.0
    %202 = vmatprep.subr.mxu0 0.0
    %203 = vmatpush1.msra.mxu0 0.0
    %204 = vmatprep.subr.mxu0 0.0
    %205 = vmatpush1.msra.mxu0 0.0
    %206 = vmatprep.subr.mxu0 0.0
    %207 = vmatpush1.msra.mxu0 0.0
    %208 = vmatprep.mubr.f32.mxu0 0.0
    %209 = vmatmul.mubr.f32.gmra.mrb[0].mxu0 %v122
    %v210 = vpop.f32.mrb[0].mxu0
    %v211 = vadd.f32 %v143, %v210
    %v212 = vpop.f32.mrb[0].mxu0
    %213 = vdwg.mxu0
    %214 = vst [vmem:[#allocation7] sm:$0xff] %v211
    // Predicated region
    $region18: #{tpu_custom_call.1} parent=1 // pred_check
      _
    $region19: #{tpu_custom_call.1} parent=1 // pred_check_branch
      %216 = sbr.rel (0) target = $region21
    $region20: #{tpu_custom_call.1} parent=1 // pred_region
      %s218 = ssub.s32 128, 128
      %219 = vsyncadd [#allocation4], %s218
      %s221 = sshll.u32 [#allocation7], 4
      %s222 = int_to_ptr.vmem [resolvable:$true] %s221
      %224 = dma.vmem_to_hbm [thread:$0]  %s222, 128, %s2, [#allocation4]
    $region21: #{tpu_custom_call.1} parent=1 // pred_fallthru
      _
    // Predicated region
    $region22: #{tpu_custom_call.1} parent=1 // pred_check
      _
    $region23: #{tpu_custom_call.1} parent=1 // pred_check_branch
      %226 = sbr.rel (0) target = $region25
    $region24: #{tpu_custom_call.1} parent=1 // pred_region
      %227 = dma.done [#allocation4], 128
    $region25: #{tpu_custom_call.1} parent=1 // pred_fallthru
      _
    %228 = vsyncpa [#allocation3], 1
    %229 = vsyncpa [#allocation6], 1
    %230 = vsyncpa [#allocation4], 1

</llo_original>
